<compile_context>
chip_gen: v5e
topology: v5e:2x2
jax: 0.10.0
libtpu: 0.0.40
codegen_flags: <defaults>
</compile_context>

<pallas_src>
import jax
import jax.numpy as jnp
from jax.experimental import pallas as pl
from jax.experimental.pallas import tpu as pltpu


def _round_up(v, m):
    return -(-v // m) * m


def _round_down(v, m):
    return (v // m) * m


def _outconv_kernel(w_ref, b_ref, x_ref, o_ref):
    # Mode A: one batch element, one pixel tile.
    # w: (C_out, C_in) resident, b: (C_out, 1) resident,
    # x: (1, C_in, TILE), o: (1, C_out, TILE)  (TILE % 128 == 0 or TILE == P)
    acc = jnp.dot(
        w_ref[...], x_ref[0],
        preferred_element_type=jnp.float32,
        precision=jax.lax.Precision.HIGHEST,
    )
    o_ref[0] = (acc + b_ref[...].astype(jnp.float32)).astype(o_ref.dtype)


def _outconv_kernel_batched(w_ref, b_ref, x_ref, o_ref):
    # Mode B: several whole (small) images per grid step.
    # w: (C_out, C_in), b: (C_out, 1), x: (B_TILE, C_in, P), o: (B_TILE, C_out, P)
    bt = x_ref.shape[0]
    w_b = jnp.broadcast_to(w_ref[...], (bt,) + w_ref.shape)      # tiny, one-shot
    acc = jnp.einsum(
        "boc,bcp->bop", w_b, x_ref[...],
        preferred_element_type=jnp.float32,
        precision=jax.lax.Precision.HIGHEST,
    )
    o_ref[...] = (acc + b_ref[...].astype(jnp.float32)[None]).astype(o_ref.dtype)


def out_conv(x_nchw, weight, bias, *, tile_p=None):
    """1x1 Conv2d forward (per-pixel matmul), NCHW in / NCHW out.

    x_nchw: (N, C_in, H, W)
    weight: (C_out, C_in, 1, 1)   (PyTorch Conv2d layout)
    bias:   (C_out,)
    returns (N, C_out, H, W), same dtype as x.
    """
    N, C_in, H, W = x_nchw.shape
    C_out = weight.shape[0]
    P = H * W
    dtype = x_nchw.dtype
    itemsize = jnp.dtype(dtype).itemsize

    # Free reshapes (row-major contiguous) -- no transposes, no padding copies.
    x3 = x_nchw.reshape(N, C_in, P)
    w_mat = weight.reshape(C_out, C_in).astype(dtype)
    b_mat = bias.reshape(C_out, 1)

    # ---- per-generation VMEM / tile sizing --------------------------------
    try:
        vmem_cap = int(pltpu.get_tpu_info().vmem_capacity_bytes)
    except Exception:
        vmem_cap = 64 * 1024 * 1024          # conservative (v7x-sized) fallback
    vmem_limit = max(32 * 1024 * 1024,
                     min(vmem_cap * 3 // 4, 100 * 1024 * 1024))
    budget = vmem_limit * 3 // 4             # headroom for weight/bias + scratch

    # Per-step HBM-traffic target (amortize ~0.35us/step overhead).  Smaller-VMEM
    # chips (v7x) have ~2.3x the HBM BW -> need ~2x the bytes per step.
    target_step_bytes = (8 if vmem_cap <= 64 * 1024 * 1024 else 4) * 1024 * 1024

    # Sublane padding of channel dims inside VMEM blocks (8 for f32, 16 for bf16).
    sub = {4: 8, 2: 16, 1: 32}.get(itemsize, 8)
    cin_pad = _round_up(C_in, sub)
    cout_pad = _round_up(C_out, sub)
    per_col_vmem = 2 * (cin_pad + cout_pad) * itemsize   # double-buffered x+out / col
    per_col_hbm = (C_in + C_out) * itemsize              # real HBM bytes / col

    cost = pl.CostEstimate(
        flops=2 * N * P * C_in * C_out,
        transcendentals=0,
        bytes_accessed=N * P * per_col_hbm
        + w_mat.size * itemsize
        + bias.size * jnp.dtype(bias.dtype).itemsize,
    )

    p_pad = _round_up(P, 128)
    per_image_vmem = per_col_vmem * p_pad
    per_image_hbm = per_col_hbm * P
    batch_fold = (N >= 2
                  and per_image_vmem <= budget
                  and per_image_hbm < target_step_bytes)

    if batch_fold:
        # ---- Mode B: fold whole (small) images into one block -------------
        b_tile = min(
            N,
            max(1, target_step_bytes // max(1, per_image_hbm)),
            max(1, budget // max(1, per_image_vmem)),
        )
        # keep a few grid steps (pipelining + both TensorCores on v7x)
        min_steps = 4 if N >= 4 else 2
        b_tile = max(1, min(b_tile, N // min_steps))

        grid = (pl.cdiv(N, b_tile),)
        out3 = pl.pallas_call(
            _outconv_kernel_batched,
            out_shape=jax.ShapeDtypeStruct((N, C_out, P), dtype),
            grid_spec=pltpu.PrefetchScalarGridSpec(
                num_scalar_prefetch=0,
                grid=grid,
                in_specs=[
                    pl.BlockSpec((C_out, C_in), lambda n: (0, 0)),   # resident
                    pl.BlockSpec((C_out, 1), lambda n: (0, 0)),      # resident
                    pl.BlockSpec((b_tile, C_in, P), lambda n: (n, 0, 0)),
                ],
                out_specs=pl.BlockSpec((b_tile, C_out, P), lambda n: (n, 0, 0)),
            ),
            compiler_params=pltpu.CompilerParams(
                dimension_semantics=("parallel",),
                vmem_limit_bytes=vmem_limit,
            ),
            cost_estimate=cost,
        )(w_mat, b_mat, x3)
    else:
        # ---- Mode A: per-image pixel tiling --------------------------------
        tile_target = _round_up(max(1, target_step_bytes // max(1, per_col_hbm)), 128)
        tile_max = max(128, _round_down(budget // max(1, per_col_vmem), 128))
        tile = min(tile_target, tile_max, _round_up(P, 128))
        if tile_p is not None:
            tile = min(tile, max(128, _round_down(int(tile_p), 128)))

        # don't let the grid collapse: keep ~>=4 steps when the problem allows it
        steps_p = pl.cdiv(P, tile)
        if N * steps_p < 4:
            want_p = min(pl.cdiv(4, N), pl.cdiv(P, 128))
            if want_p > steps_p:
                tile = max(128, _round_up(pl.cdiv(P, want_p), 128))

        if tile >= P:
            tile = P   # block == full dim satisfies the (8,128) layout rule

        grid = (N, pl.cdiv(P, tile))
        out3 = pl.pallas_call(
            _outconv_kernel,
            out_shape=jax.ShapeDtypeStruct((N, C_out, P), dtype),
            grid_spec=pltpu.PrefetchScalarGridSpec(
                num_scalar_prefetch=0,
                grid=grid,
                in_specs=[
                    pl.BlockSpec((C_out, C_in), lambda n, p: (0, 0)),  # resident
                    pl.BlockSpec((C_out, 1), lambda n, p: (0, 0)),     # resident
                    pl.BlockSpec((1, C_in, tile), lambda n, p: (n, 0, p)),
                ],
                out_specs=pl.BlockSpec((1, C_out, tile), lambda n, p: (n, 0, p)),
            ),
            compiler_params=pltpu.CompilerParams(
                dimension_semantics=("parallel", "parallel"),
                vmem_limit_bytes=vmem_limit,
            ),
            cost_estimate=cost,
        )(w_mat, b_mat, x3)

    # (N, C_out, H*W) -> (N, C_out, H, W): free reshape, no transpose.
    return out3.reshape(N, C_out, H, W)


def init_params(key, in_channels, out_channels, dtype=jnp.float32):
    # Deterministic init mimicking nn.Conv2d's default (kaiming-uniform-ish bounds).
    kw, kb = jax.random.split(key)
    fan_in = in_channels * 1 * 1
    bound = 1.0 / jnp.sqrt(fan_in)
    weight = jax.random.uniform(
        kw, (out_channels, in_channels, 1, 1), dtype, -bound, bound
    )
    bias = jax.random.uniform(kb, (out_channels,), dtype, -bound, bound)
    return weight, bias


if __name__ == "__main__":
    key = jax.random.PRNGKey(0)
    k_x, k_p = jax.random.split(key)

    N, C_in, H, W = 2, 4, 16, 16
    C_out = 3

    x = jax.random.normal(k_x, (N, C_in, H, W), dtype=jnp.float32)
    weight, bias = init_params(k_p, C_in, C_out)

    out = jax.block_until_ready(out_conv(x, weight, bias))

    # reference check (plain JAX, true-f32 precision to match the kernel)
    ref = jnp.einsum(
        "nchw,oc->nohw", x, weight.reshape(C_out, C_in),
        precision=jax.lax.Precision.HIGHEST,
    ) + bias[None, :, None, None]
    assert out.shape == (N, C_out, H, W)
    assert jnp.allclose(out, ref, atol=1e-5, rtol=1e-5)

    print("KERNEL_OK")
</pallas_src>

<mosaic_0001>
module attributes {stable_mosaic.version = 11 : i64} {
  func.func @_outconv_kernel_batched(%arg0: i32, %arg1: memref<3x4xf32, #tpu.memory_space<vmem>>, %arg2: memref<3x1xf32, #tpu.memory_space<vmem>>, %arg3: memref<1x4x256xf32, #tpu.memory_space<vmem>>, %arg4: memref<1x3x256xf32, #tpu.memory_space<vmem>>) attributes {dimension_semantics = [#tpu.dimension_semantics<parallel>], iteration_bounds = array<i64: 2>, scalar_prefetch = 0 : i64, scratch_operands = 0 : i64, tpu.core_type = #tpu.core_type<tc>, window_params = [{pipeline_mode = #tpu.pipeline_mode<synchronous>, transform_indices = @transform_0, window_bounds = array<i64: 3, 4>}, {pipeline_mode = #tpu.pipeline_mode<synchronous>, transform_indices = @transform_1, window_bounds = array<i64: 3, 1>}, {transform_indices = @transform_2, window_bounds = array<i64: 1, 4, 256>}, {transform_indices = @transform_3, window_bounds = array<i64: 1, 3, 256>}]} {
    %c0 = arith.constant 0 : index
    %c0_0 = arith.constant 0 : index
    %0 = vector.load %arg1[%c0, %c0_0] : memref<3x4xf32, #tpu.memory_space<vmem>>, vector<3x4xf32>
    %1 = vector.shape_cast %0 : vector<3x4xf32> to vector<1x3x4xf32>
    %c0_1 = arith.constant 0 : index
    %c0_2 = arith.constant 0 : index
    %c0_3 = arith.constant 0 : index
    %2 = vector.load %arg3[%c0_1, %c0_2, %c0_3] : memref<1x4x256xf32, #tpu.memory_space<vmem>>, vector<1x4x256xf32>
    "tpu.trace_start"() <{level = 10 : i32, message = "boc,bcp->bop"}> : () -> ()
    %cst = arith.constant dense<0.000000e+00> : vector<1x3x256xf32>
    %3 = tpu.matmul %1, %2, %cst {dimension_numbers = #tpu.dot_dimension_numbers<[2], [1], [1], [2], [0, 0, 0, 1, 1, 2], [0], [0]>, precision = #tpu.contract_precision<fp32>} : vector<1x3x4xf32>, vector<1x4x256xf32>, vector<1x3x256xf32> -> vector<1x3x256xf32>
    "tpu.trace_stop"() : () -> ()
    %c0_4 = arith.constant 0 : index
    %c0_5 = arith.constant 0 : index
    %4 = vector.load %arg2[%c0_4, %c0_5] : memref<3x1xf32, #tpu.memory_space<vmem>>, vector<3x1xf32>
    %5 = vector.shape_cast %4 : vector<3x1xf32> to vector<1x3x1xf32>
    %6 = vector.broadcast %5 : vector<1x3x1xf32> to vector<1x3x256xf32>
    %7 = arith.addf %3, %6 : vector<1x3x256xf32>
    %c0_6 = arith.constant 0 : index
    %c0_7 = arith.constant 0 : index
    %c0_8 = arith.constant 0 : index
    %8 = vector.load %arg4[%c0_6, %c0_7, %c0_8] : memref<1x3x256xf32, #tpu.memory_space<vmem>>, vector<1x3x256xf32>
    tpu.vector_store %arg4[%c0_6, %c0_7, %c0_8], %7 {strides = array<i32>} : memref<1x3x256xf32, #tpu.memory_space<vmem>>, vector<1x3x256xf32>,
    return
  }
  func.func @transform_0(%arg0: i32) -> (i32, i32) {
    %c0_i32 = arith.constant 0 : i32
    %c0_i32_0 = arith.constant 0 : i32
    %c0_i32_1 = arith.constant 0 : i32
    return %c0_i32, %c0_i32_0 : i32, i32
  }
  func.func @transform_1(%arg0: i32) -> (i32, i32) {
    %c0_i32 = arith.constant 0 : i32
    %c0_i32_0 = arith.constant 0 : i32
    %c0_i32_1 = arith.constant 0 : i32
    return %c0_i32, %c0_i32_0 : i32, i32
  }
  func.func @transform_2(%arg0: i32) -> (i32, i32, i32) {
    %c0_i32 = arith.constant 0 : i32
    %c0_i32_0 = arith.constant 0 : i32
    %c0_i32_1 = arith.constant 0 : i32
    return %arg0, %c0_i32, %c0_i32_0 : i32, i32, i32
  }
  func.func @transform_3(%arg0: i32) -> (i32, i32, i32) {
    %c0_i32 = arith.constant 0 : i32
    %c0_i32_0 = arith.constant 0 : i32
    %c0_i32_1 = arith.constant 0 : i32
    return %arg0, %c0_i32, %c0_i32_0 : i32, i32, i32
  }
}

</mosaic_0001>

<llo_original>
// kernel: tpu_custom_call.1
$region0: #{tpu_custom_call.1}
  #allocation0 [shape = 'u32[]', space=smem, size = 0x4, offset = 0x4, fixed_abs, tag = 'smem constant byte address 0x4 - core index']
  #allocation1 [shape = 'u32[72,128]{1,0:T(1,128)}', space=vmem, size = 0x9000, scoped, tag = 'internal scratch']
  %s0 = inlined_call_operand.vmem [shape: f32[3,4], index: 0, kind: input, shape index: {}]
  %s1 = inlined_call_operand.vmem [shape: f32[3,1], index: 1, kind: input, shape index: {}]
  %s2 = inlined_call_operand.hbm [shape: f32[2,4,256], index: 2, kind: input, shape index: {}]
  %s3 = inlined_call_operand.vmem [shape: f32[2,3,256], index: 3, kind: output, shape index: {}]
  %s4 = sld [smem:[#allocation0]]
  $region49: #{tpu_custom_call.1} parent=0
    _
  %s6 = ssub.s32 1, %s4
  %s7 = scalar_select 0, %s6, %s4
  $region1: #{tpu_custom_call.1} parent=0
    #allocation2 [shape = 'u8[8192]{0}', space=vmem, size = 0x2000, scoped, tag = 'input window, operand 2']
    #allocation3 [shape = 's32[2]{0}', space=sflag, size = 0x8, scoped, tag = 'scoped memory for tpu_custom_call.1']
    %8 = vsyncpa [#allocation3], 0
    %s9 = scalar_lea.sflag [#allocation3], 1
    %10 = vsyncpa %s9, 0
    loop: start=0, step=1, limit=4
    $region2: #{tpu_custom_call.1} parent=1 // loop_pre_header
      _
    $region3: #{tpu_custom_call.1} parent=1 // loop_header
      %s12 = sphi 0, %s16
      %p13 = scmp.ge.s32.totalorder %s12, 4
      %s20 = sphi 0, %s20
      %s22 = sphi 0, %s20
      %s23 = sphi 0, %s22
      %s37 = sphi 0, %s23
      %s41 = sphi 0, %s41
      %s43 = sphi 0, %s41
      %s44 = sphi 0, %s43
      %s58 = sphi 0, %s44
      %s64 = sphi 0, %s66
      %s67 = sphi 0, %s64
      %s68 = sphi 0, %s67
      %s84 = sphi 0, %s68
      %s90 = sphi 0, %s92
      %s93 = sphi 0, %s90
      %s94 = sphi 0, %s93
      %s110 = sphi 0, %s94
    $region4: #{tpu_custom_call.1} parent=1 // loop_header_branch
      %15 = sbr.rel (%p13) target = $region8
    $region5: #{tpu_custom_call.1} parent=1 // loop_body
      %s17 = ssub.s32 %s12, 1
      %s18 = ssub.s32 %s12, 2
      %s19 = sadd.s32 %s12, 1
      %s21 = sadd.s32 %s20, 1
      %p24 = scmp.eq.s32.totalorder %s12, 1
      %p25 = scmp.ne.s32.totalorder %s20, %s22
      %p26 = scmp.eq.s32.totalorder %s12, 0
      %p27 = por %p25, %p26
      %p28 = scmp.ne.s32.totalorder %s20, %s22
      %p29 = scmp.eq.s32.totalorder %s17, 1
      %p30 = por %p28, %p29
      %p31 = scmp.ne.s32.totalorder %s22, %s23
      %p32 = scmp.eq.s32.totalorder %s17, 0
      %p33 = por %p31, %p32
      %p34 = scmp.ne.s32.totalorder %s22, %s23
      %p35 = scmp.eq.s32.totalorder %s18, 1
      %p36 = por %p34, %p35
      %p38 = scmp.ne.s32.totalorder %s23, %s37
      %p39 = scmp.eq.s32.totalorder %s18, 0
      %p40 = por %p38, %p39
      %s42 = sadd.s32 %s41, 1
      %p45 = scmp.eq.s32.totalorder %s12, 1
      %p46 = scmp.ne.s32.totalorder %s41, %s43
      %p47 = scmp.eq.s32.totalorder %s12, 0
      %p48 = por %p46, %p47
      %p49 = scmp.ne.s32.totalorder %s41, %s43
      %p50 = scmp.eq.s32.totalorder %s17, 1
      %p51 = por %p49, %p50
      %p52 = scmp.ne.s32.totalorder %s43, %s44
      %p53 = scmp.eq.s32.totalorder %s17, 0
      %p54 = por %p52, %p53
      %p55 = scmp.ne.s32.totalorder %s43, %s44
      %p56 = scmp.eq.s32.totalorder %s18, 1
      %p57 = por %p55, %p56
      %p59 = scmp.ne.s32.totalorder %s44, %s58
      %p60 = scmp.eq.s32.totalorder %s18, 0
      %p61 = por %p59, %p60
      %s62 = ssub.s32 %s12, %s19
      %p63 = scmp.eq.s32.totalorder %s62, 0
      %s65 = sadd.s32 %s64, 1
      %s66 = scalar_select %p63, %s64, %s65
      %p69 = pneg %p63
      %p70 = scmp.eq.s32.totalorder %s12, 1
      %p71 = por %p69, %p70
      %p72 = scmp.ne.s32.totalorder %s64, %s67
      %p73 = scmp.eq.s32.totalorder %s12, 0
      %p74 = por %p72, %p73
      %p75 = scmp.ne.s32.totalorder %s64, %s67
      %p76 = scmp.eq.s32.totalorder %s17, 1
      %p77 = por %p75, %p76
      %p78 = scmp.ne.s32.totalorder %s67, %s68
      %p79 = scmp.eq.s32.totalorder %s17, 0
      %p80 = por %p78, %p79
      %p81 = scmp.ne.s32.totalorder %s67, %s68
      %p82 = scmp.eq.s32.totalorder %s18, 1
      %p83 = por %p81, %p82
      %p85 = scmp.ne.s32.totalorder %s68, %s84
      %p86 = scmp.eq.s32.totalorder %s18, 0
      %p87 = por %p85, %p86
      %s88 = ssub.s32 %s12, %s19
      %p89 = scmp.eq.s32.totalorder %s88, 0
      %s91 = sadd.s32 %s90, 1
      %s92 = scalar_select %p89, %s90, %s91
      %p95 = pneg %p89
      %p96 = scmp.eq.s32.totalorder %s12, 1
      %p97 = por %p95, %p96
      %p98 = scmp.ne.s32.totalorder %s90, %s93
      %p99 = scmp.eq.s32.totalorder %s12, 0
      %p100 = por %p98, %p99
      %p101 = scmp.ne.s32.totalorder %s90, %s93
      %p102 = scmp.eq.s32.totalorder %s17, 1
      %p103 = por %p101, %p102
      %p104 = scmp.ne.s32.totalorder %s93, %s94
      %p105 = scmp.eq.s32.totalorder %s17, 0
      %p106 = por %p104, %p105
      %p107 = scmp.ne.s32.totalorder %s93, %s94
      %p108 = scmp.eq.s32.totalorder %s18, 1
      %p109 = por %p107, %p108
      %p111 = scmp.ne.s32.totalorder %s94, %s110
      %p112 = scmp.eq.s32.totalorder %s18, 0
      %p113 = por %p111, %p112
      %p114 = scmp.le.s32.totalorder 1, %s12
      %p115 = scmp.lt.s32.totalorder %s12, 3
      %p116 = pnand %p114, %p115
      %p117 = pneg %p116
      // Predicated region
      $region9: #{tpu_custom_call.1} parent=5 // pred_check
        _
      $region10: #{tpu_custom_call.1} parent=5 // pred_check_branch
        %119 = sbr.rel (%p116) target = $region12
      $region11: #{tpu_custom_call.1} parent=5 // pred_region
        %s120 = ssub.s32 %s12, 1
        // Predicated region
        $region13: #{tpu_custom_call.1} parent=11 // pred_check
          %p121 = pneg %p33
        $region14: #{tpu_custom_call.1} parent=11 // pred_check_branch
          %123 = sbr.rel (%p121) target = $region16
        $region15: #{tpu_custom_call.1} parent=11 // pred_region
          _
        $region16: #{tpu_custom_call.1} parent=11 // pred_fallthru
          _
        // Predicated region
        $region17: #{tpu_custom_call.1} parent=11 // pred_check
          %p124 = pneg %p54
        $region18: #{tpu_custom_call.1} parent=11 // pred_check_branch
          %126 = sbr.rel (%p124) target = $region20
        $region19: #{tpu_custom_call.1} parent=11 // pred_region
          _
        $region20: #{tpu_custom_call.1} parent=11 // pred_fallthru
          _
      $region12: #{tpu_custom_call.1} parent=5 // pred_fallthru
        _
      %p127 = scmp.lt.s32.totalorder %s12, 2
      // Predicated region
      $region21: #{tpu_custom_call.1} parent=5 // pred_check
        %p128 = pneg %p127
      $region22: #{tpu_custom_call.1} parent=5 // pred_check_branch
        %130 = sbr.rel (%p128) target = $region24
      $region23: #{tpu_custom_call.1} parent=5 // pred_region
        // Predicated region
        $region25: #{tpu_custom_call.1} parent=23 // pred_check
          %p131 = pneg %p74
        $region26: #{tpu_custom_call.1} parent=23 // pred_check_branch
          %133 = sbr.rel (%p131) target = $region28
        $region27: #{tpu_custom_call.1} parent=23 // pred_region
          %s134 = sand.u32 %s64, 1
          %s135 = scalar_lea.sflag [#allocation3], %s134
          %s136 = sand.u32 %s64, 1
          %s137 = smul.addr %s136, 8
          %s138 = scalar_lea.vmem [#allocation2], %s137
          %140 = vsyncadd %s135, 0
          %s141 = smul.addr %s12, 2
          %s142 = smul.addr %s141, 4
          %s143 = scalar_lea.hbm %s2, %s142
          %s145 = sshll.u32 %s143, 4
          %s146 = int_to_ptr.hbm [resolvable:$true] %s145
          %s147 = sshll.u32 %s138, 4
          %s148 = int_to_ptr.vmem [resolvable:$true] %s147
          %150 = dma.hbm_to_vmem [thread:$0]  %s146, 128, %s148, %s135
        $region28: #{tpu_custom_call.1} parent=23 // pred_fallthru
          _
      $region24: #{tpu_custom_call.1} parent=5 // pred_fallthru
        _
      %p151 = scmp.le.s32.totalorder 1, %s12
      %p152 = scmp.lt.s32.totalorder %s12, 3
      %p153 = pnand %p151, %p152
      %p154 = pneg %p153
      // Predicated region
      $region29: #{tpu_custom_call.1} parent=5 // pred_check
        _
      $region30: #{tpu_custom_call.1} parent=5 // pred_check_branch
        %156 = sbr.rel (%p153) target = $region32
      $region31: #{tpu_custom_call.1} parent=5 // pred_region
        %s157 = ssub.s32 %s12, 1
        %s158 = sand.u32 %s67, 1
        %s159 = scalar_lea.sflag [#allocation3], %s158
        %s160 = sand.u32 %s67, 1
        %s161 = smul.addr %s160, 8
        %s162 = scalar_lea.vmem [#allocation2], %s161
        // Predicated region
        $region33: #{tpu_custom_call.1} parent=31 // pred_check
          %p163 = pneg %p80
        $region34: #{tpu_custom_call.1} parent=31 // pred_check_branch
          %165 = sbr.rel (%p163) target = $region36
        $region35: #{tpu_custom_call.1} parent=31 // pred_region
          %167 = dma.done %s159, 128
        $region36: #{tpu_custom_call.1} parent=31 // pred_fallthru
          _
        %p168 = pneg %p33
        %p169 = pneg %p30
        %p170 = pneg %p54
        %p171 = pneg %p51
        %s172 = sand.u32 %s67, 1
        %s173 = scalar_lea.sflag [#allocation3], %s172
        %s174 = sand.u32 %s67, 1
        %s175 = smul.addr %s174, 8
        %s176 = scalar_lea.vmem [#allocation2], %s175
        %p177 = pneg %p80
        %p178 = pneg %p77
        %p179 = pneg %p106
        %p180 = pneg %p103
        %p181 = scmp.lt.s32.totalorder %s17, 1
        %s182 = scalar_select %p181, %s17, 1
        %s183 = smul.addr %s182, 2
        %s184 = smul.addr %s183, 4
        %s185 = scalar_lea.vmem %s3, %s184
        %p186 = scmp.lt.s32.totalorder %s17, 1
        %s187 = scalar_select %p186, %s17, 1
        %s188 = smul.addr %s187, 2
        %s189 = smul.addr %s188, 4
        %s190 = scalar_lea.vmem %s3, %s189
        %v191 = vld [vmem:[%s0] sm:$0x7]
        %v192 = vld [vmem:[%s162] sm:$0xff]
        %v193 = vld [vmem:[%s1] sm:$0x7]
        %195 = vset.pattern.permute.xlu0 0
        %196 = vperm.xlu0 %195, %v193
        %v197 = vpop.permute.xlu0 %196
        %200 = vst [vmem:[#allocation1] ss:$2 sm:$0xff] %v192
        %v201 = vld.sshfl [vmem:[#allocation1] sm:$0xff pattern:$0x75316420]
        %v202 = vld.sshfl [vmem:[#allocation1 + $0x8] sm:$0xff pattern:$0x75316420]
        %vm203 = vcmask 31744
        %v205 = vsel %vm203, %v191, 0
        %vm207 = vcmask 1043456
        %v208 = vsel %vm207, %v201, 0
        %v210 = vsel %vm207, %v202, 0
        %212 = vmatpush.msra.mxu0 0.0
        %213 = vmatpush.msra.mxu0 0.0
        %214 = vmatpush.msra.mxu0 0.0
        %215 = vmatpush.msra.mxu0 0.0
        %216 = vmatpush.msra.mxu0 0.0
        %217 = vmatpush.msra.mxu0 0.0
        %218 = vmatpush.msra.mxu0 0.0
        %219 = vmatpush.msra.mxu0 0.0
        %220 = vmatpush.msra.mxu0 0.0
        %221 = vmatpush.msra.mxu0 0.0
        %222 = vmatpush.msra.mxu0 0.0
        %223 = vmatpush.msra.mxu0 0.0
        %224 = vmatpush.msra.mxu0 0.0
        %225 = vmatpush.msra.mxu0 0.0
        %226 = vmatpush.msra.mxu0 0.0
        %v227 = vand.u32 %v208, 4294901760
        %228 = vmatpush.msra.mxu0 %v227
        %v229 = vand.u32 %v205, 4294901760
        %v230 = vsub.f32 %v205, %v229
        %v231 = vand.u32 %v230, 4294901760
        %v232 = vsub.f32 %v230, %v231
        %v233 = vand.u32 %v232, 4294901760
        %234 = vmatmul.f32.gmra.mxu0 %v233
        %v235 = vpop.f32.mrf.mxu0
        %v236 = vadd.f32 %v197, %v235
        %237 = vdwg.mxu0
        %238 = vmatpush.msra.mxu0 0.0
        %239 = vmatpush.msra.mxu0 0.0
        %240 = vmatpush.msra.mxu0 0.0
        %241 = vmatpush.msra.mxu0 0.0
        %242 = vmatpush.msra.mxu0 0.0
        %243 = vmatpush.msra.mxu0 0.0
        %244 = vmatpush.msra.mxu0 0.0
        %245 = vmatpush.msra.mxu0 0.0
        %246 = vmatpush.msra.mxu0 0.0
        %247 = vmatpush.msra.mxu0 0.0
        %248 = vmatpush.msra.mxu0 0.0
        %249 = vmatpush.msra.mxu0 0.0
        %250 = vmatpush.msra.mxu0 0.0
        %251 = vmatpush.msra.mxu0 0.0
        %252 = vmatpush.msra.mxu0 0.0
        %v253 = vand.u32 %v208, 4294901760
        %v254 = vsub.f32 %v208, %v253
        %v255 = vand.u32 %v254, 4294901760
        %v256 = vsub.f32 %v254, %v255
        %v257 = vand.u32 %v256, 4294901760
        %258 = vmatpush.msra.mxu0 %v257
        %v259 = vand.u32 %v205, 4294901760
        %260 = vmatmul.f32.gmra.mxu0 %v259
        %v261 = vpop.f32.mrf.mxu0
        %v262 = vadd.f32 %v236, %v261
        %263 = vdwg.mxu0
        %264 = vmatpush.msra.mxu0 0.0
        %265 = vmatpush.msra.mxu0 0.0
        %266 = vmatpush.msra.mxu0 0.0
        %267 = vmatpush.msra.mxu0 0.0
        %268 = vmatpush.msra.mxu0 0.0
        %269 = vmatpush.msra.mxu0 0.0
        %270 = vmatpush.msra.mxu0 0.0
        %271 = vmatpush.msra.mxu0 0.0
        %272 = vmatpush.msra.mxu0 0.0
        %273 = vmatpush.msra.mxu0 0.0
        %274 = vmatpush.msra.mxu0 0.0
        %275 = vmatpush.msra.mxu0 0.0
        %276 = vmatpush.msra.mxu0 0.0
        %277 = vmatpush.msra.mxu0 0.0
        %278 = vmatpush.msra.mxu0 0.0
        %v279 = vand.u32 %v208, 4294901760
        %v280 = vsub.f32 %v208, %v279
        %281 = vmatpush.msra.mxu0 %v280
        %v282 = vand.u32 %v205, 4294901760
        %v283 = vsub.f32 %v205, %v282
        %284 = vmatmul.f32.gmra.mxu0 %v283
        %v285 = vpop.f32.mrf.mxu0
        %v286 = vadd.f32 %v262, %v285
        %287 = vdwg.mxu0
        %288 = vmatpush.msra.mxu0 0.0
        %289 = vmatpush.msra.mxu0 0.0
        %290 = vmatpush.msra.mxu0 0.0
        %291 = vmatpush.msra.mxu0 0.0
        %292 = vmatpush.msra.mxu0 0.0
        %293 = vmatpush.msra.mxu0 0.0
        %294 = vmatpush.msra.mxu0 0.0
        %295 = vmatpush.msra.mxu0 0.0
        %296 = vmatpush.msra.mxu0 0.0
        %297 = vmatpush.msra.mxu0 0.0
        %298 = vmatpush.msra.mxu0 0.0
        %299 = vmatpush.msra.mxu0 0.0
        %300 = vmatpush.msra.mxu0 0.0
        %301 = vmatpush.msra.mxu0 0.0
        %302 = vmatpush.msra.mxu0 0.0
        %v303 = vand.u32 %v208, 4294901760
        %304 = vmatpush.msra.mxu0 %v303
        %v305 = vand.u32 %v205, 4294901760
        %v306 = vsub.f32 %v205, %v305
        %v307 = vand.u32 %v306, 4294901760
        %308 = vmatmul.f32.gmra.mxu0 %v307
        %v309 = vpop.f32.mrf.mxu0
        %v310 = vadd.f32 %v286, %v309
        %311 = vdwg.mxu0
        %312 = vmatpush.msra.mxu0 0.0
        %313 = vmatpush.msra.mxu0 0.0
        %314 = vmatpush.msra.mxu0 0.0
        %315 = vmatpush.msra.mxu0 0.0
        %316 = vmatpush.msra.mxu0 0.0
        %317 = vmatpush.msra.mxu0 0.0
        %318 = vmatpush.msra.mxu0 0.0
        %319 = vmatpush.msra.mxu0 0.0
        %320 = vmatpush.msra.mxu0 0.0
        %321 = vmatpush.msra.mxu0 0.0
        %322 = vmatpush.msra.mxu0 0.0
        %323 = vmatpush.msra.mxu0 0.0
        %324 = vmatpush.msra.mxu0 0.0
        %325 = vmatpush.msra.mxu0 0.0
        %326 = vmatpush.msra.mxu0 0.0
        %v327 = vand.u32 %v208, 4294901760
        %v328 = vsub.f32 %v208, %v327
        %v329 = vand.u32 %v328, 4294901760
        %330 = vmatpush.msra.mxu0 %v329
        %v331 = vand.u32 %v205, 4294901760
        %332 = vmatmul.f32.gmra.mxu0 %v331
        %v333 = vpop.f32.mrf.mxu0
        %v334 = vadd.f32 %v310, %v333
        %335 = vdwg.mxu0
        %336 = vmatpush.msra.mxu0 0.0
        %337 = vmatpush.msra.mxu0 0.0
        %338 = vmatpush.msra.mxu0 0.0
        %339 = vmatpush.msra.mxu0 0.0
        %340 = vmatpush.msra.mxu0 0.0
        %341 = vmatpush.msra.mxu0 0.0
        %342 = vmatpush.msra.mxu0 0.0
        %343 = vmatpush.msra.mxu0 0.0
        %344 = vmatpush.msra.mxu0 0.0
        %345 = vmatpush.msra.mxu0 0.0
        %346 = vmatpush.msra.mxu0 0.0
        %347 = vmatpush.msra.mxu0 0.0
        %348 = vmatpush.msra.mxu0 0.0
        %349 = vmatpush.msra.mxu0 0.0
        %350 = vmatpush.msra.mxu0 0.0
        %v351 = vand.u32 %v208, 4294901760
        %352 = vmatpush.msra.mxu0 %v351
        %v353 = vand.u32 %v205, 4294901760
        %354 = vmatmul.f32.gmra.mxu0 %v353
        %v355 = vpop.f32.mrf.mxu0
        %v356 = vadd.f32 %v334, %v355
        %357 = vdwg.mxu0
        %358 = vmatpush.msra.mxu0 0.0
        %359 = vmatpush.msra.mxu0 0.0
        %360 = vmatpush.msra.mxu0 0.0
        %361 = vmatpush.msra.mxu0 0.0
        %362 = vmatpush.msra.mxu0 0.0
        %363 = vmatpush.msra.mxu0 0.0
        %364 = vmatpush.msra.mxu0 0.0
        %365 = vmatpush.msra.mxu0 0.0
        %366 = vmatpush.msra.mxu0 0.0
        %367 = vmatpush.msra.mxu0 0.0
        %368 = vmatpush.msra.mxu0 0.0
        %369 = vmatpush.msra.mxu0 0.0
        %370 = vmatpush.msra.mxu0 0.0
        %371 = vmatpush.msra.mxu0 0.0
        %372 = vmatpush.msra.mxu0 0.0
        %v373 = vand.u32 %v210, 4294901760
        %374 = vmatpush.msra.mxu0 %v373
        %v375 = vand.u32 %v205, 4294901760
        %v376 = vsub.f32 %v205, %v375
        %v377 = vand.u32 %v376, 4294901760
        %v378 = vsub.f32 %v376, %v377
        %v379 = vand.u32 %v378, 4294901760
        %380 = vmatmul.f32.gmra.mxu0 %v379
        %v381 = vpop.f32.mrf.mxu0
        %v382 = vadd.f32 %v197, %v381
        %383 = vdwg.mxu0
        %384 = vmatpush.msra.mxu0 0.0
        %385 = vmatpush.msra.mxu0 0.0
        %386 = vmatpush.msra.mxu0 0.0
        %387 = vmatpush.msra.mxu0 0.0
        %388 = vmatpush.msra.mxu0 0.0
        %389 = vmatpush.msra.mxu0 0.0
        %390 = vmatpush.msra.mxu0 0.0
        %391 = vmatpush.msra.mxu0 0.0
        %392 = vmatpush.msra.mxu0 0.0
        %393 = vmatpush.msra.mxu0 0.0
        %394 = vmatpush.msra.mxu0 0.0
        %395 = vmatpush.msra.mxu0 0.0
        %396 = vmatpush.msra.mxu0 0.0
        %397 = vmatpush.msra.mxu0 0.0
        %398 = vmatpush.msra.mxu0 0.0
        %v399 = vand.u32 %v210, 4294901760
        %v400 = vsub.f32 %v210, %v399
        %v401 = vand.u32 %v400, 4294901760
        %v402 = vsub.f32 %v400, %v401
        %v403 = vand.u32 %v402, 4294901760
        %404 = vmatpush.msra.mxu0 %v403
        %v405 = vand.u32 %v205, 4294901760
        %406 = vmatmul.f32.gmra.mxu0 %v405
        %v407 = vpop.f32.mrf.mxu0
        %v408 = vadd.f32 %v382, %v407
        %409 = vdwg.mxu0
        %410 = vmatpush.msra.mxu0 0.0
        %411 = vmatpush.msra.mxu0 0.0
        %412 = vmatpush.msra.mxu0 0.0
        %413 = vmatpush.msra.mxu0 0.0
        %414 = vmatpush.msra.mxu0 0.0
        %415 = vmatpush.msra.mxu0 0.0
        %416 = vmatpush.msra.mxu0 0.0
        %417 = vmatpush.msra.mxu0 0.0
        %418 = vmatpush.msra.mxu0 0.0
        %419 = vmatpush.msra.mxu0 0.0
        %420 = vmatpush.msra.mxu0 0.0
        %421 = vmatpush.msra.mxu0 0.0
        %422 = vmatpush.msra.mxu0 0.0
        %423 = vmatpush.msra.mxu0 0.0
        %424 = vmatpush.msra.mxu0 0.0
        %v425 = vand.u32 %v210, 4294901760
        %v426 = vsub.f32 %v210, %v425
        %427 = vmatpush.msra.mxu0 %v426
        %v428 = vand.u32 %v205, 4294901760
        %v429 = vsub.f32 %v205, %v428
        %430 = vmatmul.f32.gmra.mxu0 %v429
        %v431 = vpop.f32.mrf.mxu0
        %v432 = vadd.f32 %v408, %v431
        %433 = vdwg.mxu0
        %434 = vmatpush.msra.mxu0 0.0
        %435 = vmatpush.msra.mxu0 0.0
        %436 = vmatpush.msra.mxu0 0.0
        %437 = vmatpush.msra.mxu0 0.0
        %438 = vmatpush.msra.mxu0 0.0
        %439 = vmatpush.msra.mxu0 0.0
        %440 = vmatpush.msra.mxu0 0.0
        %441 = vmatpush.msra.mxu0 0.0
        %442 = vmatpush.msra.mxu0 0.0
        %443 = vmatpush.msra.mxu0 0.0
        %444 = vmatpush.msra.mxu0 0.0
        %445 = vmatpush.msra.mxu0 0.0
        %446 = vmatpush.msra.mxu0 0.0
        %447 = vmatpush.msra.mxu0 0.0
        %448 = vmatpush.msra.mxu0 0.0
        %v449 = vand.u32 %v210, 4294901760
        %450 = vmatpush.msra.mxu0 %v449
        %v451 = vand.u32 %v205, 4294901760
        %v452 = vsub.f32 %v205, %v451
        %v453 = vand.u32 %v452, 4294901760
        %454 = vmatmul.f32.gmra.mxu0 %v453
        %v455 = vpop.f32.mrf.mxu0
        %v456 = vadd.f32 %v432, %v455
        %457 = vdwg.mxu0
        %458 = vmatpush.msra.mxu0 0.0
        %459 = vmatpush.msra.mxu0 0.0
        %460 = vmatpush.msra.mxu0 0.0
        %461 = vmatpush.msra.mxu0 0.0
        %462 = vmatpush.msra.mxu0 0.0
        %463 = vmatpush.msra.mxu0 0.0
        %464 = vmatpush.msra.mxu0 0.0
        %465 = vmatpush.msra.mxu0 0.0
        %466 = vmatpush.msra.mxu0 0.0
        %467 = vmatpush.msra.mxu0 0.0
        %468 = vmatpush.msra.mxu0 0.0
        %469 = vmatpush.msra.mxu0 0.0
        %470 = vmatpush.msra.mxu0 0.0
        %471 = vmatpush.msra.mxu0 0.0
        %472 = vmatpush.msra.mxu0 0.0
        %v473 = vand.u32 %v210, 4294901760
        %v474 = vsub.f32 %v210, %v473
        %v475 = vand.u32 %v474, 4294901760
        %476 = vmatpush.msra.mxu0 %v475
        %v477 = vand.u32 %v205, 4294901760
        %478 = vmatmul.f32.gmra.mxu0 %v477
        %v479 = vpop.f32.mrf.mxu0
        %v480 = vadd.f32 %v456, %v479
        %481 = vdwg.mxu0
        %482 = vmatpush.msra.mxu0 0.0
        %483 = vmatpush.msra.mxu0 0.0
        %484 = vmatpush.msra.mxu0 0.0
        %485 = vmatpush.msra.mxu0 0.0
        %486 = vmatpush.msra.mxu0 0.0
        %487 = vmatpush.msra.mxu0 0.0
        %488 = vmatpush.msra.mxu0 0.0
        %489 = vmatpush.msra.mxu0 0.0
        %490 = vmatpush.msra.mxu0 0.0
        %491 = vmatpush.msra.mxu0 0.0
        %492 = vmatpush.msra.mxu0 0.0
        %493 = vmatpush.msra.mxu0 0.0
        %494 = vmatpush.msra.mxu0 0.0
        %495 = vmatpush.msra.mxu0 0.0
        %496 = vmatpush.msra.mxu0 0.0
        %v497 = vand.u32 %v210, 4294901760
        %498 = vmatpush.msra.mxu0 %v497
        %v499 = vand.u32 %v205, 4294901760
        %500 = vmatmul.f32.gmra.mxu0 %v499
        %v501 = vpop.f32.mrf.mxu0
        %v502 = vadd.f32 %v480, %v501
        %503 = vdwg.mxu0
        %v506 = vrot.slane %v502, 4
        %v507 = vsel %vm207, %v356, %v506
        %509 = vst [vmem:[%s190] sm:$0x77] %v507
        %p510 = scmp.lt.s32.totalorder %s17, 1
        %s511 = scalar_select %p510, %s17, 1
        %s512 = smul.addr %s511, 2
        %s513 = smul.addr %s512, 4
        %s514 = scalar_lea.vmem %s3, %s513
        // Predicated region
        $region37: #{tpu_custom_call.1} parent=31 // pred_check
          %p515 = pneg %p103
        $region38: #{tpu_custom_call.1} parent=31 // pred_check_branch
          %517 = sbr.rel (%p515) target = $region40
        $region39: #{tpu_custom_call.1} parent=31 // pred_region
          _
        $region40: #{tpu_custom_call.1} parent=31 // pred_fallthru
          _
      $region32: #{tpu_custom_call.1} parent=5 // pred_fallthru
        _
      %p518 = scmp.le.s32.totalorder 2, %s12
      // Predicated region
      $region41: #{tpu_custom_call.1} parent=5 // pred_check
        %p519 = pneg %p518
      $region42: #{tpu_custom_call.1} parent=5 // pred_check_branch
        %521 = sbr.rel (%p519) target = $region44
      $region43: #{tpu_custom_call.1} parent=5 // pred_region
        %s522 = ssub.s32 %s12, 2
        // Predicated region
        $region45: #{tpu_custom_call.1} parent=43 // pred_check
          %p523 = pneg %p109
        $region46: #{tpu_custom_call.1} parent=43 // pred_check_branch
          %525 = sbr.rel (%p523) target = $region48
        $region47: #{tpu_custom_call.1} parent=43 // pred_region
          %p526 = scmp.lt.s32.totalorder %s18, 1
          %s527 = scalar_select %p526, %s18, 1
          %s528 = smul.addr %s527, 2
          %s529 = smul.addr %s528, 4
          %s530 = scalar_lea.vmem %s3, %s529
        $region48: #{tpu_custom_call.1} parent=43 // pred_fallthru
          _
      $region44: #{tpu_custom_call.1} parent=5 // pred_fallthru
        _
    $region6: #{tpu_custom_call.1} parent=1 // loop_footer
      %s16 = sadd.s32 1, %s12
    $region7: #{tpu_custom_call.1} parent=1 // loop_footer_branch
      %11 = sbr.rel target = $region3
    $region8: #{tpu_custom_call.1} parent=1 // loop_exit
      _
    %531 = vsyncpa [#allocation3], 1
    %s532 = scalar_lea.sflag [#allocation3], 1
    %533 = vsyncpa %s532, 1

</llo_original>
